<compile_context>
chip_gen: v7x
topology: tpu7x:2x2x1
jax: 0.10.0
libtpu: 0.0.40
codegen_flags: <defaults>
</compile_context>

<pallas_src>
import jax
import jax.numpy as jnp
from jax.experimental import pallas as pl
from jax.experimental.pallas import tpu as pltpu


def _astro_gate_kernel(x_ref, p_ref, o_ref):
    # x_ref: (TN, P)      input dtype (packed rows of astro_trace)
    # p_ref: (P+1, P*H)   f32; rows 0..P-1 = block-diagonal weight masks,
    #                     row P = bias tiled P times.  Resident across grid.
    # o_ref: (TN, P*H)    output dtype (lane-dense when P*H is a mult. of 128)
    P = x_ref.shape[1]
    x = x_ref[...].astype(jnp.float32)                        # (TN, P)
    # bias + sum_p x[:, p] * w_mask[p]   (masks have disjoint lane support)
    acc = p_ref[P:P + 1, :] + x[:, 0:1] * p_ref[0:1, :]       # (TN, P*H)
    for p in range(1, P):                                     # static unroll, P <= 8
        acc = acc + x[:, p:p + 1] * p_ref[p:p + 1, :]
    o_ref[...] = acc.astype(o_ref.dtype)


def astro_feedback_gate(astro_trace, weight, bias):
    """astro_trace: (..., 1); weight: (H, 1); bias: (H,). Returns (..., H)."""
    assert astro_trace.shape[-1] == 1
    lead_shape = astro_trace.shape[:-1]
    H = weight.shape[0]
    N = 1
    for d in lead_shape:
        N *= d

    out_dtype = astro_trace.dtype
    out_itemsize = jnp.dtype(out_dtype).itemsize

    # Lane-packing factor: fill a 128-lane vreg row with P consecutive output
    # rows when H is a small divisor of 128.  Cap P at 8 so the 2P VPU ops per
    # output element stay below the HBM-store roofline; otherwise P=1
    # (H a multiple of 128 is already lane-dense; odd H takes the masked-store
    # fallback, which is still correct via the full-array block exemption).
    if H < 128 and 128 % H == 0 and (128 // H) <= 8:
        P = 128 // H
    else:
        P = 1
    PH = P * H

    # Packed-row tile size: ~4 MiB output blocks amortize per-step pipeline
    # overhead (<10%) while double-buffered VMEM stays well inside every
    # chip's scoped-VMEM default (v5e 16 MiB) -- 2x4 MiB out + tiny in/params.
    target_tile_bytes = 4 * 1024 * 1024
    tn = target_tile_bytes // max(PH * out_itemsize, 1)
    tn = max(8, min(16384, (tn // 8) * 8))

    n_rows = pl.cdiv(N, P)                  # packed rows needed
    if n_rows <= tn:
        tn = n_rows                         # single block: full-array exemption
    n_rows_pad = pl.cdiv(n_rows, tn) * tn
    n_pad = n_rows_pad * P

    x_flat = astro_trace.reshape(N)
    if n_pad != N:
        x_flat = jnp.pad(x_flat, (0, n_pad - N))
    x2d = x_flat.reshape(n_rows_pad, P)

    # Fused resident params: rows 0..P-1 hold w masked into its own lane group
    # (block-diagonal), row P holds bias tiled across the P groups.
    w_vec = weight.reshape(H).astype(jnp.float32)
    b_vec = bias.reshape(H).astype(jnp.float32)
    wmask = (jnp.eye(P, dtype=jnp.float32)[:, :, None]
             * w_vec[None, None, :]).reshape(P, PH)
    params = jnp.concatenate([wmask, jnp.tile(b_vec, P).reshape(1, PH)], axis=0)

    grid = (n_rows_pad // tn,)
    out_packed = pl.pallas_call(
        _astro_gate_kernel,
        out_shape=jax.ShapeDtypeStruct((n_rows_pad, PH), out_dtype),
        grid_spec=pltpu.PrefetchScalarGridSpec(
            num_scalar_prefetch=0,
            grid=grid,
            in_specs=[
                pl.BlockSpec((tn, P), lambda i: (i, 0)),
                pl.BlockSpec((P + 1, PH), lambda i: (0, 0)),   # resident params
            ],
            out_specs=pl.BlockSpec((tn, PH), lambda i: (i, 0)),
        ),
        compiler_params=pltpu.CompilerParams(
            dimension_semantics=("parallel",)),
    )(x2d, params)

    # (n_rows_pad, P*H) and (n_pad, H) are the same row-major memory.
    out_flat = out_packed.reshape(n_pad, H)
    if n_pad != N:
        out_flat = out_flat[:N]
    return out_flat.reshape(*lead_shape, H)


if __name__ == "__main__":
    key = jax.random.PRNGKey(0)
    k_x, k_w, k_b = jax.random.split(key, 3)

    batch, seq, hidden_dim = 2, 8, 32

    # nn.Linear(1, hidden_dim) init: fan_in = 1 -> U(-1, 1) for weight & bias.
    weight = jax.random.uniform(k_w, (hidden_dim, 1), jnp.float32, -1.0, 1.0)
    bias = jax.random.uniform(k_b, (hidden_dim,), jnp.float32, -1.0, 1.0)

    # astro_trace: (batch, seq, 1)
    astro_trace = jax.random.normal(k_x, (batch, seq, 1), jnp.float32)

    out = astro_feedback_gate(astro_trace, weight, bias)
    out = jax.block_until_ready(out)

    # Reference check in plain JAX (same math as nn.Linear).
    ref = astro_trace @ weight.T + bias
    assert out.shape == (batch, seq, hidden_dim)
    assert out.dtype == astro_trace.dtype
    assert jnp.allclose(out, ref, atol=1e-5, rtol=1e-5)

    print("KERNEL_OK")
</pallas_src>

<mosaic_0001>
module attributes {stable_mosaic.version = 11 : i64} {
  func.func @_astro_gate_kernel(%arg0: i32, %arg1: memref<4x4xf32, #tpu.memory_space<vmem>>, %arg2: memref<5x128xf32, #tpu.memory_space<vmem>>, %arg3: memref<4x128xf32, #tpu.memory_space<vmem>>) attributes {dimension_semantics = [#tpu.dimension_semantics<parallel>], iteration_bounds = array<i64: 1>, scalar_prefetch = 0 : i64, scratch_operands = 0 : i64, tpu.core_type = #tpu.core_type<tc>, window_params = [{transform_indices = @transform_0, window_bounds = array<i64: 4, 4>}, {pipeline_mode = #tpu.pipeline_mode<synchronous>, transform_indices = @transform_1, window_bounds = array<i64: 5, 128>}, {transform_indices = @transform_2, window_bounds = array<i64: 4, 128>}]} {
    %c0 = arith.constant 0 : index
    %c0_0 = arith.constant 0 : index
    %0 = vector.load %arg1[%c0, %c0_0] : memref<4x4xf32, #tpu.memory_space<vmem>>, vector<4x4xf32>
    %c4 = arith.constant 4 : index
    %c0_1 = arith.constant 0 : index
    %1 = vector.load %arg2[%c4, %c0_1] : memref<5x128xf32, #tpu.memory_space<vmem>>, vector<1x128xf32>
    %2 = vector.extract_strided_slice %0 {offsets = [0, 0], sizes = [4, 1], strides = [1, 1]} : vector<4x4xf32> to vector<4x1xf32>
    %c0_2 = arith.constant 0 : index
    %c0_3 = arith.constant 0 : index
    %3 = vector.load %arg2[%c0_2, %c0_3] : memref<5x128xf32, #tpu.memory_space<vmem>>, vector<1x128xf32>
    %4 = vector.broadcast %2 : vector<4x1xf32> to vector<4x128xf32>
    %5 = vector.broadcast %3 : vector<1x128xf32> to vector<4x128xf32>
    %6 = arith.mulf %4, %5 : vector<4x128xf32>
    %7 = vector.broadcast %1 : vector<1x128xf32> to vector<4x128xf32>
    %8 = arith.addf %7, %6 : vector<4x128xf32>
    %9 = vector.extract_strided_slice %0 {offsets = [0, 1], sizes = [4, 1], strides = [1, 1]} : vector<4x4xf32> to vector<4x1xf32>
    %c1 = arith.constant 1 : index
    %c0_4 = arith.constant 0 : index
    %10 = vector.load %arg2[%c1, %c0_4] : memref<5x128xf32, #tpu.memory_space<vmem>>, vector<1x128xf32>
    %11 = vector.broadcast %9 : vector<4x1xf32> to vector<4x128xf32>
    %12 = vector.broadcast %10 : vector<1x128xf32> to vector<4x128xf32>
    %13 = arith.mulf %11, %12 : vector<4x128xf32>
    %14 = arith.addf %8, %13 : vector<4x128xf32>
    %15 = vector.extract_strided_slice %0 {offsets = [0, 2], sizes = [4, 1], strides = [1, 1]} : vector<4x4xf32> to vector<4x1xf32>
    %c2 = arith.constant 2 : index
    %c0_5 = arith.constant 0 : index
    %16 = vector.load %arg2[%c2, %c0_5] : memref<5x128xf32, #tpu.memory_space<vmem>>, vector<1x128xf32>
    %17 = vector.broadcast %15 : vector<4x1xf32> to vector<4x128xf32>
    %18 = vector.broadcast %16 : vector<1x128xf32> to vector<4x128xf32>
    %19 = arith.mulf %17, %18 : vector<4x128xf32>
    %20 = arith.addf %14, %19 : vector<4x128xf32>
    %21 = vector.extract_strided_slice %0 {offsets = [0, 3], sizes = [4, 1], strides = [1, 1]} : vector<4x4xf32> to vector<4x1xf32>
    %c3 = arith.constant 3 : index
    %c0_6 = arith.constant 0 : index
    %22 = vector.load %arg2[%c3, %c0_6] : memref<5x128xf32, #tpu.memory_space<vmem>>, vector<1x128xf32>
    %23 = vector.broadcast %21 : vector<4x1xf32> to vector<4x128xf32>
    %24 = vector.broadcast %22 : vector<1x128xf32> to vector<4x128xf32>
    %25 = arith.mulf %23, %24 : vector<4x128xf32>
    %26 = arith.addf %20, %25 : vector<4x128xf32>
    %c0_7 = arith.constant 0 : index
    %c0_8 = arith.constant 0 : index
    %27 = vector.load %arg3[%c0_7, %c0_8] : memref<4x128xf32, #tpu.memory_space<vmem>>, vector<4x128xf32>
    tpu.vector_store %arg3[%c0_7, %c0_8], %26 {strides = array<i32>} : memref<4x128xf32, #tpu.memory_space<vmem>>, vector<4x128xf32>,
    return
  }
  func.func @transform_0(%arg0: i32) -> (i32, i32) {
    %c0_i32 = arith.constant 0 : i32
    %c0_i32_0 = arith.constant 0 : i32
    return %arg0, %c0_i32 : i32, i32
  }
  func.func @transform_1(%arg0: i32) -> (i32, i32) {
    %c0_i32 = arith.constant 0 : i32
    %c0_i32_0 = arith.constant 0 : i32
    %c0_i32_1 = arith.constant 0 : i32
    return %c0_i32, %c0_i32_0 : i32, i32
  }
  func.func @transform_2(%arg0: i32) -> (i32, i32) {
    %c0_i32 = arith.constant 0 : i32
    %c0_i32_0 = arith.constant 0 : i32
    return %arg0, %c0_i32 : i32, i32
  }
}

</mosaic_0001>

<llo_original>
// kernel: tpu_custom_call.1
$region0: #{tpu_custom_call.1}
  #allocation0 [shape = 'u32[]', space=smem, size = 0x4, offset = 0x4, fixed_abs, tag = 'smem constant byte address 0x4 - core index']
  #allocation1 [shape = 'u32[144,128]{1,0:T(1,128)}', space=vmem, size = 0x12000, scoped, tag = 'internal scratch']
  %s0 = inlined_call_operand.hbm [shape: f32[4,4], index: 0, kind: input, shape index: {}]
  %s1 = inlined_call_operand.hbm [shape: f32[5,128], index: 1, kind: input, shape index: {}]
  %s2 = inlined_call_operand.hbm [shape: f32[4,128], index: 2, kind: output, shape index: {}]
  %s3 = sld [smem:[#allocation0]]
  $region26: #{tpu_custom_call.1} parent=0
    _
  %s5 = ssub.s32 1, %s3
  %s6 = scalar_select 0, %s5, %s3
  $region1: #{tpu_custom_call.1} parent=0
    #allocation2 [shape = 'u8[2048]{0}', space=vmem, size = 0x800, scoped, tag = 'input window, operand 0, single buffered']
    #allocation3 [shape = 's32[1]{0}', space=sflag, size = 0x4, scoped, tag = 'scoped memory for tpu_custom_call.1']
    #allocation4 [shape = 's32[1]{0}', space=sflag, size = 0x4, scoped, tag = 'scoped memory for tpu_custom_call.1']
    #allocation5 [shape = 'u8[4096]{0}', space=vmem, size = 0x1000, scoped, tag = 'input window, operand 1, single buffered']
    #allocation6 [shape = 's32[1]{0}', space=sflag, size = 0x4, scoped, tag = 'scoped memory for tpu_custom_call.1']
    #allocation7 [shape = 'u8[2048]{0}', space=vmem, size = 0x800, scoped, tag = 'output window, operand 0, single buffered']
    %7 = vsyncpa [#allocation3], 0
    %8 = vsyncpa [#allocation6], 0
    %9 = vsyncpa [#allocation4], 0
    // Predicated region
    $region2: #{tpu_custom_call.1} parent=1 // pred_check
      _
    $region3: #{tpu_custom_call.1} parent=1 // pred_check_branch
      %11 = sbr.rel (0) target = $region5
    $region4: #{tpu_custom_call.1} parent=1 // pred_region
      %s13 = ssub.s32 64, 64
      %14 = vsyncadd [#allocation3], %s13
      %s16 = sshll.u32 [#allocation2], 4
      %s17 = int_to_ptr.vmem [resolvable:$true] %s16
      %19 = dma.hbm_to_vmem [thread:$0]  %s0, 64, %s17, [#allocation3]
    $region5: #{tpu_custom_call.1} parent=1 // pred_fallthru
      _
    // Predicated region
    $region6: #{tpu_custom_call.1} parent=1 // pred_check
      _
    $region7: #{tpu_custom_call.1} parent=1 // pred_check_branch
      %21 = sbr.rel (0) target = $region9
    $region8: #{tpu_custom_call.1} parent=1 // pred_region
      %s23 = ssub.s32 128, 128
      %24 = vsyncadd [#allocation6], %s23
      %s26 = sshll.u32 [#allocation5], 4
      %s27 = int_to_ptr.vmem [resolvable:$true] %s26
      %29 = dma.hbm_to_vmem [thread:$0]  %s1, 128, %s27, [#allocation6]
    $region9: #{tpu_custom_call.1} parent=1 // pred_fallthru
      _
    // Predicated region
    $region10: #{tpu_custom_call.1} parent=1 // pred_check
      _
    $region11: #{tpu_custom_call.1} parent=1 // pred_check_branch
      %31 = sbr.rel (0) target = $region13
    $region12: #{tpu_custom_call.1} parent=1 // pred_region
      %32 = dma.done [#allocation3], 64
    $region13: #{tpu_custom_call.1} parent=1 // pred_fallthru
      _
    // Predicated region
    $region14: #{tpu_custom_call.1} parent=1 // pred_check
      _
    $region15: #{tpu_custom_call.1} parent=1 // pred_check_branch
      %34 = sbr.rel (0) target = $region17
    $region16: #{tpu_custom_call.1} parent=1 // pred_region
      %35 = dma.done [#allocation6], 128
    $region17: #{tpu_custom_call.1} parent=1 // pred_fallthru
      _
    %v36 = vld [vmem:[#allocation2] sm:$0xf]
    %v37 = vld [vmem:[#allocation5 + $0x4] sm:$0x1]
    %v38 = vld [vmem:[#allocation5] sm:$0x1]
    %40 = vset.pattern.permute.xlu0 0
    %41 = vperm.xlu0 %40, %v36
    %v42 = vpop.permute.xlu0 %41
    %v44 = vlaneseq
    %v45 = vshrl.u32 %v44, 7
    %v46 = vsub.s32 0, %v45
    %v47 = vrot.slane %v38, %v46
    %v48 = vmul.f32 %v42, %v47
    %v49 = vlaneseq
    %v50 = vshrl.u32 %v49, 7
    %v51 = vsub.s32 0, %v50
    %v52 = vrot.slane %v37, %v51
    %v53 = vadd.f32 %v52, %v48
    %v54 = vld [vmem:[#allocation5 + $0x1] sm:$0x1]
    %55 = vset.pattern.permute.xlu0 1
    %56 = vperm.xlu0 %55, %v36
    %v57 = vpop.permute.xlu0 %56
    %v59 = vlaneseq
    %v60 = vshrl.u32 %v59, 7
    %v61 = vsub.s32 0, %v60
    %v62 = vrot.slane %v54, %v61
    %v63 = vmul.f32 %v57, %v62
    %v64 = vadd.f32 %v53, %v63
    %v65 = vld [vmem:[#allocation5 + $0x2] sm:$0x1]
    %66 = vset.pattern.permute.xlu0 2
    %67 = vperm.xlu0 %66, %v36
    %v68 = vpop.permute.xlu0 %67
    %v70 = vlaneseq
    %v71 = vshrl.u32 %v70, 7
    %v72 = vsub.s32 0, %v71
    %v73 = vrot.slane %v65, %v72
    %v74 = vmul.f32 %v68, %v73
    %v75 = vadd.f32 %v64, %v74
    %v76 = vld [vmem:[#allocation5 + $0x3] sm:$0x1]
    %77 = vset.pattern.permute.xlu0 3
    %78 = vperm.xlu0 %77, %v36
    %v79 = vpop.permute.xlu0 %78
    %v81 = vlaneseq
    %v82 = vshrl.u32 %v81, 7
    %v83 = vsub.s32 0, %v82
    %v84 = vrot.slane %v76, %v83
    %v85 = vmul.f32 %v79, %v84
    %v86 = vadd.f32 %v75, %v85
    %87 = vst [vmem:[#allocation7] sm:$0xf] %v86
    // Predicated region
    $region18: #{tpu_custom_call.1} parent=1 // pred_check
      _
    $region19: #{tpu_custom_call.1} parent=1 // pred_check_branch
      %89 = sbr.rel (0) target = $region21
    $region20: #{tpu_custom_call.1} parent=1 // pred_region
      %s91 = ssub.s32 64, 64
      %92 = vsyncadd [#allocation4], %s91
      %s94 = sshll.u32 [#allocation7], 4
      %s95 = int_to_ptr.vmem [resolvable:$true] %s94
      %97 = dma.vmem_to_hbm [thread:$0]  %s95, 64, %s2, [#allocation4]
    $region21: #{tpu_custom_call.1} parent=1 // pred_fallthru
      _
    // Predicated region
    $region22: #{tpu_custom_call.1} parent=1 // pred_check
      _
    $region23: #{tpu_custom_call.1} parent=1 // pred_check_branch
      %99 = sbr.rel (0) target = $region25
    $region24: #{tpu_custom_call.1} parent=1 // pred_region
      %100 = dma.done [#allocation4], 64
    $region25: #{tpu_custom_call.1} parent=1 // pred_fallthru
      _
    %101 = vsyncpa [#allocation3], 1
    %102 = vsyncpa [#allocation6], 1
    %103 = vsyncpa [#allocation4], 1

</llo_original>
